<compile_context>
chip_gen: v5e
topology: v5e:2x2
jax: 0.10.0
libtpu: 0.0.40
codegen_flags: <defaults>
</compile_context>

<pallas_src>
import functools

import jax
import jax.numpy as jnp
from jax import lax
from jax.experimental import pallas as pl
from jax.experimental.pallas import tpu as pltpu

LANES = 128
SUBLANES = 8


def _round_up(v, m):
    return (v + m - 1) // m * m


def _neg_mean_partial_kernel(x_ref, o_ref, *, tile_rows, total_rows):
    """Streams (tile_rows, 128) tiles and accumulates an (8, 128) f32 partial."""
    t = pl.program_id(0)

    # Zero the resident (8, 128) output accumulator on the first step.
    @pl.when(t == 0)
    def _():
        o_ref[...] = jnp.zeros_like(o_ref)

    row_start = t * tile_rows
    is_full = row_start + tile_rows <= total_rows

    # Hot path: cast + leading-axis reduce into one vreg-worth accumulator.
    # Pure VPU adds (no XLU), fully hidden under the HBM DMA stream.
    @pl.when(is_full)
    def _():
        x = x_ref[...].astype(jnp.float32)
        o_ref[...] += jnp.sum(
            x.reshape(tile_rows // SUBLANES, SUBLANES, LANES), axis=0)

    # Ragged last tile: rows past the end of the slab hold undefined data from
    # the partial-block DMA; mask them to zero (select, so garbage/NaN is safe).
    @pl.when(jnp.logical_not(is_full))
    def _():
        row_ids = row_start + lax.broadcasted_iota(
            jnp.int32, (tile_rows, LANES), 0)
        x = jnp.where(row_ids < total_rows,
                      x_ref[...].astype(jnp.float32), 0.0)
        o_ref[...] += jnp.sum(
            x.reshape(tile_rows // SUBLANES, SUBLANES, LANES), axis=0)


def generator_loss(x, *, tile_rows=None, block_bytes=4 * 1024 * 1024):
    """Pallas TPU implementation of GeneratorLoss.forward: returns -x.mean()."""
    numel = x.size
    acc_dtype = jnp.float32
    flat = jnp.ravel(x)                        # reshape/view only, no HBM copy

    is_float = jnp.issubdtype(x.dtype, jnp.floating)

    # Small-input fast path: launch overhead would dominate reading the data.
    if numel < SUBLANES * LANES:
        result = -jnp.mean(flat.astype(acc_dtype))
        return result.astype(x.dtype) if is_float else result

    itemsize = jnp.dtype(x.dtype).itemsize
    sublane_pack = {4: 8, 2: 16, 1: 32}.get(itemsize, 8)   # dtype-aware packing

    rows = numel // LANES                      # full 128-wide rows
    tail = numel - rows * LANES                # < 128 leftover elements

    if tail:
        # TODO(synk): this head slice materializes one extra HBM copy of the
        # bulk for non-128-divisible sizes; a fully in-kernel masked 1D variant
        # would remove it.  The 128-divisible path below is zero-copy.
        main = flat[:rows * LANES]
        tail_sum = jnp.sum(flat[rows * LANES:].astype(acc_dtype))
    else:
        main = flat                            # zero-copy reshape path
        tail_sum = jnp.zeros((), acc_dtype)

    x2d = main.reshape(rows, LANES)

    if tile_rows is None:
        # ~4 MiB input block per grid step (f32 -> 8192 rows, bf16 -> 16384).
        # Double-buffered: ~8 MiB VMEM, under all default scoped-VMEM limits.
        tile_rows = max(sublane_pack, block_bytes // (LANES * itemsize))
    tile_rows = _round_up(
        max(sublane_pack, min(tile_rows, _round_up(rows, sublane_pack))),
        sublane_pack)

    num_tiles = pl.cdiv(rows, tile_rows)

    kernel = functools.partial(
        _neg_mean_partial_kernel, tile_rows=tile_rows, total_rows=rows)

    partial = pl.pallas_call(
        kernel,
        out_shape=jax.ShapeDtypeStruct((SUBLANES, LANES), acc_dtype),
        grid_spec=pltpu.PrefetchScalarGridSpec(
            num_scalar_prefetch=0,
            grid=(num_tiles,),
            in_specs=[pl.BlockSpec((tile_rows, LANES), lambda t: (t, 0))],
            # Constant block index => output stays resident in VMEM across the
            # whole grid and acts as the accumulator (written back once).
            out_specs=pl.BlockSpec((SUBLANES, LANES), lambda t: (0, 0)),
        ),
        compiler_params=pltpu.CompilerParams(
            dimension_semantics=("arbitrary",)),
    )(x2d)

    total = jnp.sum(partial) + tail_sum        # tiny final lane/sublane reduce
    result = -(total / numel)
    if is_float:
        result = result.astype(x.dtype)
    return result


if __name__ == "__main__":
    key = jax.random.PRNGKey(0)
    k1, k2 = jax.random.split(key)

    # Small NCHW input: 128-divisible => zero-copy reshape, single full tile.
    x1 = jax.random.normal(k1, (2, 4, 16, 16), dtype=jnp.float32)
    loss1 = jax.block_until_ready(jax.jit(generator_loss)(x1))
    ref1 = -jnp.mean(x1)
    assert jnp.allclose(loss1, ref1, atol=1e-6, rtol=1e-6), (loss1, ref1)

    # Non-divisible size: exercises multi-step accumulation (tile_rows=64),
    # the masked ragged last tile, and the <128-element tail in the wrapper.
    x2 = jax.random.normal(k2, (3, 5, 37, 41), dtype=jnp.float32)
    loss2 = jax.block_until_ready(
        jax.jit(lambda a: generator_loss(a, tile_rows=64))(x2))
    ref2 = -jnp.mean(x2)
    assert jnp.allclose(loss2, ref2, atol=1e-5, rtol=1e-5), (loss2, ref2)

    print("KERNEL_OK")
</pallas_src>

<mosaic_0001>
module attributes {stable_mosaic.version = 11 : i64} {
  func.func @_neg_mean_partial_kernel(%arg0: i32, %arg1: memref<16x128xf32, #tpu.memory_space<vmem>>, %arg2: memref<8x128xf32, #tpu.memory_space<vmem>>) attributes {dimension_semantics = [#tpu.dimension_semantics<arbitrary>], iteration_bounds = array<i64: 1>, scalar_prefetch = 0 : i64, scratch_operands = 0 : i64, tpu.core_type = #tpu.core_type<tc>, window_params = [{transform_indices = @transform_0, window_bounds = array<i64: 16, 128>}, {pipeline_mode = #tpu.pipeline_mode<synchronous>, transform_indices = @transform_1, window_bounds = array<i64: 8, 128>}]} {
    %c0_i32 = arith.constant 0 : i32
    %0 = arith.cmpi eq, %arg0, %c0_i32 : i32
    %1 = arith.extui %0 : i1 to i32
    %c0_i32_0 = arith.constant 0 : i32
    %2 = arith.cmpi ne, %1, %c0_i32_0 : i32
    scf.if %2 {
      %cst = arith.constant 0.000000e+00 : f32
      %11 = vector.broadcast %cst : f32 to vector<8x128xf32>
      %c0 = arith.constant 0 : index
      %c0_5 = arith.constant 0 : index
      %12 = vector.load %arg2[%c0, %c0_5] : memref<8x128xf32, #tpu.memory_space<vmem>>, vector<8x128xf32>
      tpu.vector_store %arg2[%c0, %c0_5], %11 {strides = array<i32>} : memref<8x128xf32, #tpu.memory_space<vmem>>, vector<8x128xf32>,
    } else {
    }
    %c16_i32 = arith.constant 16 : i32
    %3 = arith.muli %arg0, %c16_i32 : i32
    %c16_i32_1 = arith.constant 16 : i32
    %4 = arith.addi %3, %c16_i32_1 : i32
    %c16_i32_2 = arith.constant 16 : i32
    %5 = arith.cmpi sle, %4, %c16_i32_2 : i32
    %6 = arith.extui %5 : i1 to i32
    %c0_i32_3 = arith.constant 0 : i32
    %7 = arith.cmpi ne, %6, %c0_i32_3 : i32
    scf.if %7 {
      %c0 = arith.constant 0 : index
      %c0_5 = arith.constant 0 : index
      %11 = vector.load %arg1[%c0, %c0_5] : memref<16x128xf32, #tpu.memory_space<vmem>>, vector<16x128xf32>
      %c0_6 = arith.constant 0 : index
      %c0_7 = arith.constant 0 : index
      %12 = vector.load %arg2[%c0_6, %c0_7] : memref<8x128xf32, #tpu.memory_space<vmem>>, vector<8x128xf32>
      %13 = vector.shape_cast %11 : vector<16x128xf32> to vector<2x8x128xf32>
      %cst = arith.constant dense<0.000000e+00> : vector<8x128xf32>
      %14 = vector.multi_reduction <add>, %13, %cst [0] : vector<2x8x128xf32> to vector<8x128xf32>
      %15 = arith.addf %12, %14 : vector<8x128xf32>
      %c0_8 = arith.constant 0 : index
      %c0_9 = arith.constant 0 : index
      %16 = vector.load %arg2[%c0_8, %c0_9] : memref<8x128xf32, #tpu.memory_space<vmem>>, vector<8x128xf32>
      tpu.vector_store %arg2[%c0_8, %c0_9], %15 {strides = array<i32>} : memref<8x128xf32, #tpu.memory_space<vmem>>, vector<8x128xf32>,
    } else {
    }
    %true = arith.constant true
    %8 = arith.xori %5, %true : i1
    %9 = arith.extui %8 : i1 to i32
    %c0_i32_4 = arith.constant 0 : i32
    %10 = arith.cmpi ne, %9, %c0_i32_4 : i32
    scf.if %10 {
      %11 = tpu.iota {dimensions = array<i32: 0>} : vector<16x128xi32>
      %12 = vector.broadcast %3 : i32 to vector<16x128xi32>
      %13 = arith.addi %12, %11 : vector<16x128xi32>
      %c16_i32_5 = arith.constant 16 : i32
      %14 = vector.broadcast %c16_i32_5 : i32 to vector<16x128xi32>
      %15 = arith.cmpi slt, %13, %14 : vector<16x128xi32>
      %c0 = arith.constant 0 : index
      %c0_6 = arith.constant 0 : index
      %16 = vector.load %arg1[%c0, %c0_6] : memref<16x128xf32, #tpu.memory_space<vmem>>, vector<16x128xf32>
      %cst = arith.constant 0.000000e+00 : f32
      %17 = vector.broadcast %cst : f32 to vector<16x128xf32>
      %18 = arith.select %15, %16, %17 : vector<16x128xi1>, vector<16x128xf32>
      %c0_7 = arith.constant 0 : index
      %c0_8 = arith.constant 0 : index
      %19 = vector.load %arg2[%c0_7, %c0_8] : memref<8x128xf32, #tpu.memory_space<vmem>>, vector<8x128xf32>
      %20 = vector.shape_cast %18 : vector<16x128xf32> to vector<2x8x128xf32>
      %cst_9 = arith.constant dense<0.000000e+00> : vector<8x128xf32>
      %21 = vector.multi_reduction <add>, %20, %cst_9 [0] : vector<2x8x128xf32> to vector<8x128xf32>
      %22 = arith.addf %19, %21 : vector<8x128xf32>
      %c0_10 = arith.constant 0 : index
      %c0_11 = arith.constant 0 : index
      %23 = vector.load %arg2[%c0_10, %c0_11] : memref<8x128xf32, #tpu.memory_space<vmem>>, vector<8x128xf32>
      tpu.vector_store %arg2[%c0_10, %c0_11], %22 {strides = array<i32>} : memref<8x128xf32, #tpu.memory_space<vmem>>, vector<8x128xf32>,
    } else {
    }
    return
  }
  func.func @transform_0(%arg0: i32) -> (i32, i32) {
    %c0_i32 = arith.constant 0 : i32
    %c0_i32_0 = arith.constant 0 : i32
    return %arg0, %c0_i32 : i32, i32
  }
  func.func @transform_1(%arg0: i32) -> (i32, i32) {
    %c0_i32 = arith.constant 0 : i32
    %c0_i32_0 = arith.constant 0 : i32
    %c0_i32_1 = arith.constant 0 : i32
    return %c0_i32, %c0_i32_0 : i32, i32
  }
}

</mosaic_0001>

<llo_original>
// kernel: generator_loss.1
$region0: #{generator_loss.1}
  #allocation0 [shape = 'u32[]', space=smem, size = 0x4, offset = 0x4, fixed_abs, tag = 'smem constant byte address 0x4 - core index']
  #allocation1 [shape = 'u32[72,128]{1,0:T(1,128)}', space=vmem, size = 0x9000, scoped, tag = 'internal scratch']
  %s0 = inlined_call_operand.vmem [shape: f32[16,128], index: 0, kind: input, shape index: {}]
  %s1 = inlined_call_operand.vmem [shape: f32[8,128], index: 1, kind: output, shape index: {}]
  %s2 = sld [smem:[#allocation0]]
  $region26: #{generator_loss.1} parent=0
    _
  %s4 = ssub.s32 1, %s2
  %s5 = scalar_select 0, %s4, %s2
  // Predicated region
  $region2: #{generator_loss.1} parent=0 // pred_check
    _
  $region3: #{generator_loss.1} parent=0 // pred_check_branch
    %7 = sbr.rel (0) target = $region5
  $region4: #{generator_loss.1} parent=0 // pred_region
    _
  $region5: #{generator_loss.1} parent=0 // pred_fallthru
    _
  %p8 = scmp.eq.s32.totalorder 0, 0
  // Predicated region
  $region6: #{generator_loss.1} parent=0 // pred_check
    %p9 = pneg %p8
  $region7: #{generator_loss.1} parent=0 // pred_check_branch
    %11 = sbr.rel (%p9) target = $region9
  $region8: #{generator_loss.1} parent=0 // pred_region
    %12 = vst [vmem:[%s1] sm:$0xff] 0.0
  $region9: #{generator_loss.1} parent=0 // pred_fallthru
    _
  %s13 = smul.u32 0, 16
  %s14 = sadd.s32 %s13, 16
  %p15 = scmp.le.s32.totalorder %s14, 16
  // Predicated region
  $region10: #{generator_loss.1} parent=0 // pred_check
    %p16 = pneg %p15
  $region11: #{generator_loss.1} parent=0 // pred_check_branch
    %18 = sbr.rel (%p16) target = $region13
  $region12: #{generator_loss.1} parent=0 // pred_region
    %v19 = vld [vmem:[%s0] sm:$0xff]
    %v20 = vld [vmem:[%s0 + $0x8] sm:$0xff]
    %v21 = vld [vmem:[%s1] sm:$0xff]
    %v22 = vadd.f32 %v19, %v20
    %v23 = vadd.f32 %v21, %v22
    %24 = vst [vmem:[%s1] sm:$0xff] %v23
  $region13: #{generator_loss.1} parent=0 // pred_fallthru
    _
  %p25 = scmp.gt.s32.totalorder %s14, 16
  // Predicated region
  $region14: #{generator_loss.1} parent=0 // pred_check
    %p26 = pneg %p25
  $region15: #{generator_loss.1} parent=0 // pred_check_branch
    %28 = sbr.rel (%p26) target = $region17
  $region16: #{generator_loss.1} parent=0 // pred_region
    %v29 = vlaneseq
    %v30 = vshrl.u32 %v29, 7
    %v31 = vadd.s32 %v30, 8
    %v32 = vstv %s13
    %v33 = vadd.s32 %v32, %v30
    %v34 = vadd.s32 %v32, %v31
    %vm35 = vcmp.lt.s32.totalorder %v33, 16
    %vm36 = vcmp.lt.s32.totalorder %v34, 16
    %v37 = vld [vmem:[%s0] sm:$0xff]
    %v38 = vld [vmem:[%s0 + $0x8] sm:$0xff]
    %v39 = vsel %vm35, %v37, 0.0
    %v40 = vsel %vm36, %v38, 0.0
    %v41 = vld [vmem:[%s1] sm:$0xff]
    %v42 = vadd.f32 %v39, %v40
    %v43 = vadd.f32 %v41, %v42
    %44 = vst [vmem:[%s1] sm:$0xff] %v43
  $region17: #{generator_loss.1} parent=0 // pred_fallthru
    _
  // Predicated region
  $region18: #{generator_loss.1} parent=0 // pred_check
    _
  $region19: #{generator_loss.1} parent=0 // pred_check_branch
    %46 = sbr.rel (0) target = $region21
  $region20: #{generator_loss.1} parent=0 // pred_region
    _
  $region21: #{generator_loss.1} parent=0 // pred_fallthru
    _
  // Predicated region
  $region22: #{generator_loss.1} parent=0 // pred_check
    _
  $region23: #{generator_loss.1} parent=0 // pred_check_branch
    %48 = sbr.rel (0) target = $region25
  $region24: #{generator_loss.1} parent=0 // pred_region
    _
  $region25: #{generator_loss.1} parent=0 // pred_fallthru
    _

</llo_original>
